<compile_context>
chip_gen: v5e
topology: v5e:2x2
jax: 0.10.0
libtpu: 0.0.40
codegen_flags: <defaults>
</compile_context>

<pallas_src>
import functools

import jax
import jax.numpy as jnp
from jax.experimental import pallas as pl
from jax.experimental.pallas import tpu as pltpu

LANE = 128      # vreg lane width
SUBLANE = 8     # f32 sublane width


def _round_up(x, m):
    return (x + m - 1) // m * m


def _actor_kernel(x_ref, w1_ref, b1_ref, wmid_ref, bmid_ref, w5_ref, b5_ref,
                  out_ref):
    """Fused forward: relu(xW1+b1) -> relu(.W2..4+b2..4) -> .W5+b5."""

    def layer(h, w, b):
        # Cast activations to the weight dtype only at the MXU input; the
        # accumulate and the bias add / ReLU stay in f32.
        y = jnp.dot(h.astype(w.dtype), w, preferred_element_type=jnp.float32)
        return y + b

    h = x_ref[...]                                          # (tile_b, S) f32
    h = jnp.maximum(layer(h, w1_ref[...], b1_ref[...]), 0.0)
    for k in range(3):          # static unroll; [k] is a free static view
        h = jnp.maximum(layer(h, wmid_ref[k], bmid_ref[k]), 0.0)
    out_ref[...] = layer(h, w5_ref[...], b5_ref[...]).astype(out_ref.dtype)


def init_actor_params(key, state_dim, action_dim, hidden=10):
    """Deterministic init mirroring nn.Linear default (uniform +-1/sqrt(fan_in)).

    Weights stored as (in_features, out_features), biases as (1, out_features)."""
    dims = [state_dim, hidden, hidden, hidden, hidden, action_dim]
    params = {}
    for i in range(5):
        fan_in, fan_out = dims[i], dims[i + 1]
        key, kw, kb = jax.random.split(key, 3)
        bound = 1.0 / jnp.sqrt(jnp.float32(fan_in))
        params[f"w{i+1}"] = jax.random.uniform(
            kw, (fan_in, fan_out), jnp.float32, -bound, bound)
        params[f"b{i+1}"] = jax.random.uniform(
            kb, (1, fan_out), jnp.float32, -bound, bound)
    return params


def pad_actor_params(params, weight_dtype=jnp.bfloat16):
    """Pack/pad weights for the kernel (one time, outside jit).

    * Hidden dim (10) is zero-padded to 128 lanes -- intermediates never touch
      HBM, and zero rows/cols/biases keep real lanes exact through ReLU/matmul.
    * W1 keeps its real input rows (state_dim) and W5 its real output columns
      (action_dim), so the kernel streams the un-padded state and writes the
      un-padded action directly (no wrapper pad / post-kernel slice).
    * The three 128x128 middle layers are packed into (3,128,128)/(3,1,128).
    * Weights default to bf16 (native MXU dtype, halves weight DMA / MXU
      passes); biases stay f32; accumulation is always f32.  Pass
      weight_dtype=jnp.float32 for bit-tight results vs an f32 reference."""
    hidden = params["w1"].shape[1]
    H = _round_up(hidden, LANE)
    S = params["w1"].shape[0]
    A = params["w5"].shape[1]

    w1 = jnp.zeros((S, H), weight_dtype).at[:, :hidden].set(
        params["w1"].astype(weight_dtype))
    b1 = jnp.zeros((1, H), jnp.float32).at[:, :hidden].set(
        params["b1"].astype(jnp.float32))

    wmid = jnp.zeros((3, H, H), weight_dtype)
    bmid = jnp.zeros((3, 1, H), jnp.float32)
    for k, li in enumerate((2, 3, 4)):
        w = params[f"w{li}"]
        b = params[f"b{li}"]
        wmid = wmid.at[k, :w.shape[0], :w.shape[1]].set(w.astype(weight_dtype))
        bmid = bmid.at[k, :, :b.shape[1]].set(b.astype(jnp.float32))

    w5 = jnp.zeros((H, A), weight_dtype).at[:hidden, :].set(
        params["w5"].astype(weight_dtype))
    b5 = params["b5"].astype(jnp.float32)
    return dict(w1=w1, b1=b1, wmid=wmid, bmid=bmid, w5=w5, b5=b5)


@functools.partial(jax.jit, static_argnames=("max_tile_b",))
def actor_forward(state, padded_params, max_tile_b=2048):
    """state: (B, state_dim).  padded_params: output of pad_actor_params.

    One pallas_call; batch tiled over a 1-D "parallel" grid (pipelined and
    megacore-sharded), weights/biases VMEM-resident via constant index_maps."""
    if state.dtype != jnp.float32:
        state = state.astype(jnp.float32)
    B, S = state.shape
    w1, b1 = padded_params["w1"], padded_params["b1"]
    wmid, bmid = padded_params["wmid"], padded_params["bmid"]
    w5, b5 = padded_params["w5"], padded_params["b5"]
    assert w1.shape[0] == S, "state_dim mismatch with padded params"
    H = w1.shape[1]
    A = w5.shape[1]

    # Batch tile: large enough to amortize grid-step/DMA overhead, balanced so
    # the last tile isn't mostly padding, >=2 tiles when the batch allows so
    # v7x's two TensorCores each get work, rounded to the f32 sublane width.
    # At tile_b=2048 the double-buffered in/out + f32 intermediates are a few
    # MiB -- comfortably inside the scoped VMEM limit on v5e/v6e/v7x.
    if B <= 2 * SUBLANE:
        tile_b = B                      # single tile; block dim == full array dim
    else:
        n_tiles = max(pl.cdiv(B, max_tile_b), 2)
        tile_b = _round_up(pl.cdiv(B, n_tiles), SUBLANE)
    grid = (pl.cdiv(B, tile_b),)

    cost = pl.CostEstimate(
        flops=2 * B * (S * H + 3 * H * H + H * A),
        transcendentals=0,
        bytes_accessed=(B * S * 4 + B * A * 4
                        + w1.size * w1.dtype.itemsize
                        + wmid.size * wmid.dtype.itemsize
                        + w5.size * w5.dtype.itemsize
                        + (b1.size + bmid.size + b5.size) * 4),
    )

    return pl.pallas_call(
        _actor_kernel,
        out_shape=jax.ShapeDtypeStruct((B, A), jnp.float32),
        grid=grid,
        in_specs=[
            pl.BlockSpec((tile_b, S), lambda i: (i, 0)),   # streamed batch tiles
            pl.BlockSpec(w1.shape, lambda i: (0, 0)),      # VMEM-resident weights
            pl.BlockSpec(b1.shape, lambda i: (0, 0)),
            pl.BlockSpec(wmid.shape, lambda i: (0, 0, 0)),
            pl.BlockSpec(bmid.shape, lambda i: (0, 0, 0)),
            pl.BlockSpec(w5.shape, lambda i: (0, 0)),
            pl.BlockSpec(b5.shape, lambda i: (0, 0)),
        ],
        out_specs=pl.BlockSpec((tile_b, A), lambda i: (i, 0)),
        compiler_params=pltpu.CompilerParams(
            dimension_semantics=("parallel",),   # shard batch tiles across TCs (v7x)
            vmem_limit_bytes=32 * 1024 * 1024,
        ),
        cost_estimate=cost,
    )(state, w1, b1, wmid, bmid, w5, b5)


def actor_forward_ref(state, params):
    """Plain-JAX f32 reference for correctness checking."""
    h = state
    for i in range(1, 5):
        h = jnp.maximum(h @ params[f"w{i}"] + params[f"b{i}"], 0.0)
    return h @ params["w5"] + params["b5"]


if __name__ == "__main__":
    key = jax.random.PRNGKey(0)
    key, k_state, k_big = jax.random.split(key, 3)

    batch, state_dim, action_dim = 2, 32, 8
    state = jax.random.normal(k_state, (batch, state_dim), jnp.float32)

    params = init_actor_params(key, state_dim, action_dim)

    # 1) f32-weight path: bit-tight vs the f32 reference (structural check).
    padded_f32 = pad_actor_params(params, weight_dtype=jnp.float32)
    out = jax.block_until_ready(actor_forward(state, padded_f32))
    ref = actor_forward_ref(state, params)
    assert out.shape == (batch, action_dim)
    assert jnp.allclose(out, ref, atol=1e-5, rtol=1e-5)

    # 2) Default bf16-weight path: matches the f32 reference to bf16 accuracy.
    padded = pad_actor_params(params)
    out_bf16 = jax.block_until_ready(actor_forward(state, padded))
    assert out_bf16.shape == (batch, action_dim)
    assert jnp.allclose(out_bf16, ref, atol=5e-2, rtol=5e-2)

    # 3) Larger batch not divisible by the tile: exercises the multi-tile
    #    "parallel" grid and the masked (partial) last block.
    big_batch = 1000
    big_state = jax.random.normal(k_big, (big_batch, state_dim), jnp.float32)
    big_out = jax.block_until_ready(actor_forward(big_state, padded))
    big_ref = actor_forward_ref(big_state, params)
    assert big_out.shape == (big_batch, action_dim)
    assert jnp.allclose(big_out, big_ref, atol=5e-2, rtol=5e-2)

    print("KERNEL_OK")
</pallas_src>

<mosaic_0001>
module attributes {stable_mosaic.version = 11 : i64} {
  func.func @_actor_kernel(%arg0: i32, %arg1: memref<2x32xf32, #tpu.memory_space<vmem>>, %arg2: memref<32x128xf32, #tpu.memory_space<vmem>>, %arg3: memref<1x128xf32, #tpu.memory_space<vmem>>, %arg4: memref<3x128x128xf32, #tpu.memory_space<vmem>>, %arg5: memref<3x1x128xf32, #tpu.memory_space<vmem>>, %arg6: memref<128x8xf32, #tpu.memory_space<vmem>>, %arg7: memref<1x8xf32, #tpu.memory_space<vmem>>, %arg8: memref<2x8xf32, #tpu.memory_space<vmem>>) attributes {dimension_semantics = [#tpu.dimension_semantics<parallel>], iteration_bounds = array<i64: 1>, scalar_prefetch = 0 : i64, scratch_operands = 0 : i64, tpu.core_type = #tpu.core_type<tc>, window_params = [{transform_indices = @transform_0, window_bounds = array<i64: 2, 32>}, {pipeline_mode = #tpu.pipeline_mode<synchronous>, transform_indices = @transform_1, window_bounds = array<i64: 32, 128>}, {pipeline_mode = #tpu.pipeline_mode<synchronous>, transform_indices = @transform_2, window_bounds = array<i64: 1, 128>}, {pipeline_mode = #tpu.pipeline_mode<synchronous>, transform_indices = @transform_3, window_bounds = array<i64: 3, 128, 128>}, {pipeline_mode = #tpu.pipeline_mode<synchronous>, transform_indices = @transform_4, window_bounds = array<i64: 3, 1, 128>}, {pipeline_mode = #tpu.pipeline_mode<synchronous>, transform_indices = @transform_5, window_bounds = array<i64: 128, 8>}, {pipeline_mode = #tpu.pipeline_mode<synchronous>, transform_indices = @transform_6, window_bounds = array<i64: 1, 8>}, {transform_indices = @transform_7, window_bounds = array<i64: 2, 8>}]} {
    %c0 = arith.constant 0 : index
    %c0_0 = arith.constant 0 : index
    %0 = vector.load %arg1[%c0, %c0_0] : memref<2x32xf32, #tpu.memory_space<vmem>>, vector<2x32xf32>
    %c0_1 = arith.constant 0 : index
    %c0_2 = arith.constant 0 : index
    %1 = vector.load %arg2[%c0_1, %c0_2] : memref<32x128xf32, #tpu.memory_space<vmem>>, vector<32x128xf32>
    %c0_3 = arith.constant 0 : index
    %c0_4 = arith.constant 0 : index
    %2 = vector.load %arg3[%c0_3, %c0_4] : memref<1x128xf32, #tpu.memory_space<vmem>>, vector<1x128xf32>
    %cst = arith.constant dense<0.000000e+00> : vector<2x128xf32>
    %3 = tpu.matmul %0, %1, %cst {dimension_numbers = #tpu.dot_dimension_numbers<[1], [0], [0], [1], [0, 0, 1, 1], [], []>} : vector<2x32xf32>, vector<32x128xf32>, vector<2x128xf32> -> vector<2x128xf32>
    %4 = vector.broadcast %2 : vector<1x128xf32> to vector<2x128xf32>
    %5 = arith.addf %3, %4 : vector<2x128xf32>
    %cst_5 = arith.constant 0.000000e+00 : f32
    %6 = vector.broadcast %cst_5 : f32 to vector<2x128xf32>
    %7 = arith.maximumf %5, %6 : vector<2x128xf32>
    %c0_6 = arith.constant 0 : index
    %c0_7 = arith.constant 0 : index
    %c0_8 = arith.constant 0 : index
    %8 = vector.load %arg4[%c0_6, %c0_7, %c0_8] : memref<3x128x128xf32, #tpu.memory_space<vmem>>, vector<1x128x128xf32>
    %9 = vector.shape_cast %8 : vector<1x128x128xf32> to vector<128x128xf32>
    %c0_9 = arith.constant 0 : index
    %c0_10 = arith.constant 0 : index
    %c0_11 = arith.constant 0 : index
    %10 = vector.load %arg5[%c0_9, %c0_10, %c0_11] : memref<3x1x128xf32, #tpu.memory_space<vmem>>, vector<1x1x128xf32>
    %11 = vector.shape_cast %10 : vector<1x1x128xf32> to vector<1x128xf32>
    %cst_12 = arith.constant dense<0.000000e+00> : vector<2x128xf32>
    %12 = tpu.matmul %7, %9, %cst_12 {dimension_numbers = #tpu.dot_dimension_numbers<[1], [0], [0], [1], [0, 0, 1, 1], [], []>} : vector<2x128xf32>, vector<128x128xf32>, vector<2x128xf32> -> vector<2x128xf32>
    %13 = vector.broadcast %11 : vector<1x128xf32> to vector<2x128xf32>
    %14 = arith.addf %12, %13 : vector<2x128xf32>
    %cst_13 = arith.constant 0.000000e+00 : f32
    %15 = vector.broadcast %cst_13 : f32 to vector<2x128xf32>
    %16 = arith.maximumf %14, %15 : vector<2x128xf32>
    %c1 = arith.constant 1 : index
    %c0_14 = arith.constant 0 : index
    %c0_15 = arith.constant 0 : index
    %17 = vector.load %arg4[%c1, %c0_14, %c0_15] : memref<3x128x128xf32, #tpu.memory_space<vmem>>, vector<1x128x128xf32>
    %18 = vector.shape_cast %17 : vector<1x128x128xf32> to vector<128x128xf32>
    %c1_16 = arith.constant 1 : index
    %c0_17 = arith.constant 0 : index
    %c0_18 = arith.constant 0 : index
    %19 = vector.load %arg5[%c1_16, %c0_17, %c0_18] : memref<3x1x128xf32, #tpu.memory_space<vmem>>, vector<1x1x128xf32>
    %20 = vector.shape_cast %19 : vector<1x1x128xf32> to vector<1x128xf32>
    %cst_19 = arith.constant dense<0.000000e+00> : vector<2x128xf32>
    %21 = tpu.matmul %16, %18, %cst_19 {dimension_numbers = #tpu.dot_dimension_numbers<[1], [0], [0], [1], [0, 0, 1, 1], [], []>} : vector<2x128xf32>, vector<128x128xf32>, vector<2x128xf32> -> vector<2x128xf32>
    %22 = vector.broadcast %20 : vector<1x128xf32> to vector<2x128xf32>
    %23 = arith.addf %21, %22 : vector<2x128xf32>
    %cst_20 = arith.constant 0.000000e+00 : f32
    %24 = vector.broadcast %cst_20 : f32 to vector<2x128xf32>
    %25 = arith.maximumf %23, %24 : vector<2x128xf32>
    %c2 = arith.constant 2 : index
    %c0_21 = arith.constant 0 : index
    %c0_22 = arith.constant 0 : index
    %26 = vector.load %arg4[%c2, %c0_21, %c0_22] : memref<3x128x128xf32, #tpu.memory_space<vmem>>, vector<1x128x128xf32>
    %27 = vector.shape_cast %26 : vector<1x128x128xf32> to vector<128x128xf32>
    %c2_23 = arith.constant 2 : index
    %c0_24 = arith.constant 0 : index
    %c0_25 = arith.constant 0 : index
    %28 = vector.load %arg5[%c2_23, %c0_24, %c0_25] : memref<3x1x128xf32, #tpu.memory_space<vmem>>, vector<1x1x128xf32>
    %29 = vector.shape_cast %28 : vector<1x1x128xf32> to vector<1x128xf32>
    %cst_26 = arith.constant dense<0.000000e+00> : vector<2x128xf32>
    %30 = tpu.matmul %25, %27, %cst_26 {dimension_numbers = #tpu.dot_dimension_numbers<[1], [0], [0], [1], [0, 0, 1, 1], [], []>} : vector<2x128xf32>, vector<128x128xf32>, vector<2x128xf32> -> vector<2x128xf32>
    %31 = vector.broadcast %29 : vector<1x128xf32> to vector<2x128xf32>
    %32 = arith.addf %30, %31 : vector<2x128xf32>
    %cst_27 = arith.constant 0.000000e+00 : f32
    %33 = vector.broadcast %cst_27 : f32 to vector<2x128xf32>
    %34 = arith.maximumf %32, %33 : vector<2x128xf32>
    %c0_28 = arith.constant 0 : index
    %c0_29 = arith.constant 0 : index
    %35 = vector.load %arg6[%c0_28, %c0_29] : memref<128x8xf32, #tpu.memory_space<vmem>>, vector<128x8xf32>
    %c0_30 = arith.constant 0 : index
    %c0_31 = arith.constant 0 : index
    %36 = vector.load %arg7[%c0_30, %c0_31] : memref<1x8xf32, #tpu.memory_space<vmem>>, vector<1x8xf32>
    %cst_32 = arith.constant dense<0.000000e+00> : vector<2x8xf32>
    %37 = tpu.matmul %34, %35, %cst_32 {dimension_numbers = #tpu.dot_dimension_numbers<[1], [0], [0], [1], [0, 0, 1, 1], [], []>} : vector<2x128xf32>, vector<128x8xf32>, vector<2x8xf32> -> vector<2x8xf32>
    %38 = vector.broadcast %36 : vector<1x8xf32> to vector<2x8xf32>
    %39 = arith.addf %37, %38 : vector<2x8xf32>
    %c0_33 = arith.constant 0 : index
    %c0_34 = arith.constant 0 : index
    %40 = vector.load %arg8[%c0_33, %c0_34] : memref<2x8xf32, #tpu.memory_space<vmem>>, vector<2x8xf32>
    tpu.vector_store %arg8[%c0_33, %c0_34], %39 {strides = array<i32>} : memref<2x8xf32, #tpu.memory_space<vmem>>, vector<2x8xf32>,
    return
  }
  func.func @transform_0(%arg0: i32) -> (i32, i32) {
    %c0_i32 = arith.constant 0 : i32
    %c0_i32_0 = arith.constant 0 : i32
    return %arg0, %c0_i32 : i32, i32
  }
  func.func @transform_1(%arg0: i32) -> (i32, i32) {
    %c0_i32 = arith.constant 0 : i32
    %c0_i32_0 = arith.constant 0 : i32
    %c0_i32_1 = arith.constant 0 : i32
    return %c0_i32, %c0_i32_0 : i32, i32
  }
  func.func @transform_2(%arg0: i32) -> (i32, i32) {
    %c0_i32 = arith.constant 0 : i32
    %c0_i32_0 = arith.constant 0 : i32
    %c0_i32_1 = arith.constant 0 : i32
    return %c0_i32, %c0_i32_0 : i32, i32
  }
  func.func @transform_3(%arg0: i32) -> (i32, i32, i32) {
    %c0_i32 = arith.constant 0 : i32
    %c0_i32_0 = arith.constant 0 : i32
    %c0_i32_1 = arith.constant 0 : i32
    %c0_i32_2 = arith.constant 0 : i32
    return %c0_i32, %c0_i32_0, %c0_i32_1 : i32, i32, i32
  }
  func.func @transform_4(%arg0: i32) -> (i32, i32, i32) {
    %c0_i32 = arith.constant 0 : i32
    %c0_i32_0 = arith.constant 0 : i32
    %c0_i32_1 = arith.constant 0 : i32
    %c0_i32_2 = arith.constant 0 : i32
    return %c0_i32, %c0_i32_0, %c0_i32_1 : i32, i32, i32
  }
  func.func @transform_5(%arg0: i32) -> (i32, i32) {
    %c0_i32 = arith.constant 0 : i32
    %c0_i32_0 = arith.constant 0 : i32
    %c0_i32_1 = arith.constant 0 : i32
    return %c0_i32, %c0_i32_0 : i32, i32
  }
  func.func @transform_6(%arg0: i32) -> (i32, i32) {
    %c0_i32 = arith.constant 0 : i32
    %c0_i32_0 = arith.constant 0 : i32
    %c0_i32_1 = arith.constant 0 : i32
    return %c0_i32, %c0_i32_0 : i32, i32
  }
  func.func @transform_7(%arg0: i32) -> (i32, i32) {
    %c0_i32 = arith.constant 0 : i32
    %c0_i32_0 = arith.constant 0 : i32
    return %arg0, %c0_i32 : i32, i32
  }
}

</mosaic_0001>

<llo_original>
// kernel: actor_forward.1
$region0: #{actor_forward.1}
  #allocation0 [shape = 'u32[]', space=smem, size = 0x4, offset = 0x4, fixed_abs, tag = 'smem constant byte address 0x4 - core index']
  #allocation1 [shape = 'u32[72,128]{1,0:T(1,128)}', space=vmem, size = 0x9000, scoped, tag = 'internal scratch']
  %s0 = inlined_call_operand.vmem [shape: f32[2,32], index: 0, kind: input, shape index: {}]
  %s1 = inlined_call_operand.vmem [shape: f32[32,128], index: 1, kind: input, shape index: {}]
  %s2 = inlined_call_operand.vmem [shape: f32[1,128], index: 2, kind: input, shape index: {}]
  %s3 = inlined_call_operand.hbm [shape: f32[3,128,128], index: 3, kind: input, shape index: {}]
  %s4 = inlined_call_operand.vmem [shape: f32[3,1,128], index: 4, kind: input, shape index: {}]
  %s5 = inlined_call_operand.vmem [shape: f32[128,8], index: 5, kind: input, shape index: {}]
  %s6 = inlined_call_operand.vmem [shape: f32[1,8], index: 6, kind: input, shape index: {}]
  %s7 = inlined_call_operand.hbm [shape: f32[2,8], index: 7, kind: output, shape index: {}]
  %s8 = sld [smem:[#allocation0]]
  $region42: #{actor_forward.1} parent=0
    _
  %s10 = ssub.s32 1, %s8
  %s11 = scalar_select 0, %s10, %s8
  $region1: #{actor_forward.1} parent=0
    #allocation2 [shape = 'u8[196608]{0}', space=vmem, size = 0x30000, scoped, tag = 'input window, operand 3, single buffered']
    #allocation3 [shape = 's32[1]{0}', space=sflag, size = 0x4, scoped, tag = 'scoped memory for actor_forward.1']
    #allocation4 [shape = 's32[1]{0}', space=sflag, size = 0x4, scoped, tag = 'scoped memory for actor_forward.1']
    #allocation5 [shape = 'u8[1024]{0}', space=vmem, size = 0x400, scoped, tag = 'output window, operand 0, single buffered']
    %12 = vsyncpa [#allocation3], 0
    %13 = vsyncpa [#allocation4], 0
    // Predicated region
    $region2: #{actor_forward.1} parent=1 // pred_check
      _
    $region3: #{actor_forward.1} parent=1 // pred_check_branch
      %15 = sbr.rel (0) target = $region5
    $region4: #{actor_forward.1} parent=1 // pred_region
      _
    $region5: #{actor_forward.1} parent=1 // pred_fallthru
      _
    // Predicated region
    $region6: #{actor_forward.1} parent=1 // pred_check
      _
    $region7: #{actor_forward.1} parent=1 // pred_check_branch
      %17 = sbr.rel (0) target = $region9
    $region8: #{actor_forward.1} parent=1 // pred_region
      _
    $region9: #{actor_forward.1} parent=1 // pred_fallthru
      _
    // Predicated region
    $region10: #{actor_forward.1} parent=1 // pred_check
      _
    $region11: #{actor_forward.1} parent=1 // pred_check_branch
      %19 = sbr.rel (0) target = $region13
    $region12: #{actor_forward.1} parent=1 // pred_region
      _
    $region13: #{actor_forward.1} parent=1 // pred_fallthru
      _
    // Predicated region
    $region14: #{actor_forward.1} parent=1 // pred_check
      _
    $region15: #{actor_forward.1} parent=1 // pred_check_branch
      %21 = sbr.rel (0) target = $region17
    $region16: #{actor_forward.1} parent=1 // pred_region
      %23 = vsyncadd [#allocation3], 0
      %s24 = sshll.u32 %s3, 4
      %s25 = int_to_ptr.hbm [resolvable:$true] %s24
      %s26 = sshll.u32 [#allocation2], 4
      %s27 = int_to_ptr.vmem [resolvable:$true] %s26
      %32 = dma.hbm_to_vmem [thread:$0]  %s25, 6144, %s27, [#allocation3], 128, 128, 8
    $region17: #{actor_forward.1} parent=1 // pred_fallthru
      _
    // Predicated region
    $region18: #{actor_forward.1} parent=1 // pred_check
      _
    $region19: #{actor_forward.1} parent=1 // pred_check_branch
      %34 = sbr.rel (0) target = $region21
    $region20: #{actor_forward.1} parent=1 // pred_region
      _
    $region21: #{actor_forward.1} parent=1 // pred_fallthru
      _
    // Predicated region
    $region22: #{actor_forward.1} parent=1 // pred_check
      _
    $region23: #{actor_forward.1} parent=1 // pred_check_branch
      %36 = sbr.rel (0) target = $region25
    $region24: #{actor_forward.1} parent=1 // pred_region
      _
    $region25: #{actor_forward.1} parent=1 // pred_fallthru
      _
    // Predicated region
    $region26: #{actor_forward.1} parent=1 // pred_check
      _
    $region27: #{actor_forward.1} parent=1 // pred_check_branch
      %38 = sbr.rel (0) target = $region29
    $region28: #{actor_forward.1} parent=1 // pred_region
      _
    $region29: #{actor_forward.1} parent=1 // pred_fallthru
      _
    // Predicated region
    $region30: #{actor_forward.1} parent=1 // pred_check
      _
    $region31: #{actor_forward.1} parent=1 // pred_check_branch
      %40 = sbr.rel (0) target = $region33
    $region32: #{actor_forward.1} parent=1 // pred_region
      %42 = dma.done [#allocation3], 6144
    $region33: #{actor_forward.1} parent=1 // pred_fallthru
      _
    %v43 = vld [vmem:[%s0] sm:$0x3]
    %v44 = vld [vmem:[%s1] sm:$0xff]
    %v45 = vld [vmem:[%s1 + $0x8] sm:$0xff]
    %v46 = vld [vmem:[%s1 + $0x10] sm:$0xff]
    %v47 = vld [vmem:[%s1 + $0x18] sm:$0xff]
    %v48 = vld [vmem:[%s2] sm:$0x1]
    %v50 = vperm.slane %v48, 0
    %vm52 = vcmask 261120
    %v54 = vsel %vm52, %v43, 0
    %56 = vmatpush.msra.mxu0 0.0
    %57 = vmatpush.msra.mxu0 0.0
    %58 = vmatpush.msra.mxu0 0.0
    %59 = vmatpush.msra.mxu0 0.0
    %60 = vmatpush.msra.mxu0 0.0
    %61 = vmatpush.msra.mxu0 0.0
    %62 = vmatpush.msra.mxu0 0.0
    %63 = vmatpush.msra.mxu0 0.0
    %64 = vmatpush.msra.mxu0 0.0
    %65 = vmatpush.msra.mxu0 0.0
    %66 = vmatpush.msra.mxu0 0.0
    %67 = vmatpush.msra.mxu0 0.0
    %68 = vmatpush.msra.mxu0 %v47
    %69 = vmatpush.msra.mxu0 %v46
    %70 = vmatpush.msra.mxu0 %v45
    %71 = vmatpush.msra.mxu0 %v44
    %72 = vmatmul.f32.gmra.mxu0 %v54
    %v73 = vpop.f32.mrf.mxu0
    %v74 = vadd.f32 %v50, %v73
    %75 = vdwg.mxu0
    %v76 = vmax.f32 %v74, 0.0
    %v77 = vld [vmem:[#allocation2] sm:$0xff]
    %v78 = vld [vmem:[#allocation2 + $0x8] sm:$0xff]
    %v79 = vld [vmem:[#allocation2 + $0x10] sm:$0xff]
    %v80 = vld [vmem:[#allocation2 + $0x18] sm:$0xff]
    %v81 = vld [vmem:[#allocation2 + $0x20] sm:$0xff]
    %v82 = vld [vmem:[#allocation2 + $0x28] sm:$0xff]
    %v83 = vld [vmem:[#allocation2 + $0x30] sm:$0xff]
    %v84 = vld [vmem:[#allocation2 + $0x38] sm:$0xff]
    %v85 = vld [vmem:[#allocation2 + $0x40] sm:$0xff]
    %v86 = vld [vmem:[#allocation2 + $0x48] sm:$0xff]
    %v87 = vld [vmem:[#allocation2 + $0x50] sm:$0xff]
    %v88 = vld [vmem:[#allocation2 + $0x58] sm:$0xff]
    %v89 = vld [vmem:[#allocation2 + $0x60] sm:$0xff]
    %v90 = vld [vmem:[#allocation2 + $0x68] sm:$0xff]
    %v91 = vld [vmem:[#allocation2 + $0x70] sm:$0xff]
    %v92 = vld [vmem:[#allocation2 + $0x78] sm:$0xff]
    %v93 = vld [vmem:[%s4] sm:$0x1]
    %v95 = vperm.slane %v93, 0
    %97 = vmatpush.msra.mxu0 %v92
    %98 = vmatpush.msra.mxu0 %v91
    %99 = vmatpush.msra.mxu0 %v90
    %100 = vmatpush.msra.mxu0 %v89
    %101 = vmatpush.msra.mxu0 %v88
    %102 = vmatpush.msra.mxu0 %v87
    %103 = vmatpush.msra.mxu0 %v86
    %104 = vmatpush.msra.mxu0 %v85
    %105 = vmatpush.msra.mxu0 %v84
    %106 = vmatpush.msra.mxu0 %v83
    %107 = vmatpush.msra.mxu0 %v82
    %108 = vmatpush.msra.mxu0 %v81
    %109 = vmatpush.msra.mxu0 %v80
    %110 = vmatpush.msra.mxu0 %v79
    %111 = vmatpush.msra.mxu0 %v78
    %112 = vmatpush.msra.mxu0 %v77
    %113 = vmatmul.f32.gmra.mxu0 %v76
    %v114 = vpop.f32.mrf.mxu0
    %v115 = vadd.f32 %v95, %v114
    %116 = vdwg.mxu0
    %v117 = vmax.f32 %v115, 0.0
    %s118 = scalar_lea.vmem [#allocation2], 128
    %v119 = vld [vmem:[%s118] sm:$0xff]
    %v120 = vld [vmem:[%s118 + $0x8] sm:$0xff]
    %v121 = vld [vmem:[%s118 + $0x10] sm:$0xff]
    %v122 = vld [vmem:[%s118 + $0x18] sm:$0xff]
    %v123 = vld [vmem:[%s118 + $0x20] sm:$0xff]
    %v124 = vld [vmem:[%s118 + $0x28] sm:$0xff]
    %v125 = vld [vmem:[%s118 + $0x30] sm:$0xff]
    %v126 = vld [vmem:[%s118 + $0x38] sm:$0xff]
    %v127 = vld [vmem:[%s118 + $0x40] sm:$0xff]
    %v128 = vld [vmem:[%s118 + $0x48] sm:$0xff]
    %v129 = vld [vmem:[%s118 + $0x50] sm:$0xff]
    %v130 = vld [vmem:[%s118 + $0x58] sm:$0xff]
    %v131 = vld [vmem:[%s118 + $0x60] sm:$0xff]
    %v132 = vld [vmem:[%s118 + $0x68] sm:$0xff]
    %v133 = vld [vmem:[%s118 + $0x70] sm:$0xff]
    %v134 = vld [vmem:[%s118 + $0x78] sm:$0xff]
    %s135 = scalar_lea.vmem %s4, 1
    %v136 = vld [vmem:[%s135] sm:$0x1]
    %v138 = vperm.slane %v136, 0
    %140 = vmatpush.msra.mxu0 %v134
    %141 = vmatpush.msra.mxu0 %v133
    %142 = vmatpush.msra.mxu0 %v132
    %143 = vmatpush.msra.mxu0 %v131
    %144 = vmatpush.msra.mxu0 %v130
    %145 = vmatpush.msra.mxu0 %v129
    %146 = vmatpush.msra.mxu0 %v128
    %147 = vmatpush.msra.mxu0 %v127
    %148 = vmatpush.msra.mxu0 %v126
    %149 = vmatpush.msra.mxu0 %v125
    %150 = vmatpush.msra.mxu0 %v124
    %151 = vmatpush.msra.mxu0 %v123
    %152 = vmatpush.msra.mxu0 %v122
    %153 = vmatpush.msra.mxu0 %v121
    %154 = vmatpush.msra.mxu0 %v120
    %155 = vmatpush.msra.mxu0 %v119
    %156 = vmatmul.f32.gmra.mxu0 %v117
    %v157 = vpop.f32.mrf.mxu0
    %v158 = vadd.f32 %v138, %v157
    %159 = vdwg.mxu0
    %v160 = vmax.f32 %v158, 0.0
    %s161 = scalar_lea.vmem [#allocation2], 256
    %v162 = vld [vmem:[%s161] sm:$0xff]
    %v163 = vld [vmem:[%s161 + $0x8] sm:$0xff]
    %v164 = vld [vmem:[%s161 + $0x10] sm:$0xff]
    %v165 = vld [vmem:[%s161 + $0x18] sm:$0xff]
    %v166 = vld [vmem:[%s161 + $0x20] sm:$0xff]
    %v167 = vld [vmem:[%s161 + $0x28] sm:$0xff]
    %v168 = vld [vmem:[%s161 + $0x30] sm:$0xff]
    %v169 = vld [vmem:[%s161 + $0x38] sm:$0xff]
    %v170 = vld [vmem:[%s161 + $0x40] sm:$0xff]
    %v171 = vld [vmem:[%s161 + $0x48] sm:$0xff]
    %v172 = vld [vmem:[%s161 + $0x50] sm:$0xff]
    %v173 = vld [vmem:[%s161 + $0x58] sm:$0xff]
    %v174 = vld [vmem:[%s161 + $0x60] sm:$0xff]
    %v175 = vld [vmem:[%s161 + $0x68] sm:$0xff]
    %v176 = vld [vmem:[%s161 + $0x70] sm:$0xff]
    %v177 = vld [vmem:[%s161 + $0x78] sm:$0xff]
    %s178 = scalar_lea.vmem %s4, 2
    %v179 = vld [vmem:[%s178] sm:$0x1]
    %v181 = vperm.slane %v179, 0
    %183 = vmatpush.msra.mxu0 %v177
    %184 = vmatpush.msra.mxu0 %v176
    %185 = vmatpush.msra.mxu0 %v175
    %186 = vmatpush.msra.mxu0 %v174
    %187 = vmatpush.msra.mxu0 %v173
    %188 = vmatpush.msra.mxu0 %v172
    %189 = vmatpush.msra.mxu0 %v171
    %190 = vmatpush.msra.mxu0 %v170
    %191 = vmatpush.msra.mxu0 %v169
    %192 = vmatpush.msra.mxu0 %v168
    %193 = vmatpush.msra.mxu0 %v167
    %194 = vmatpush.msra.mxu0 %v166
    %195 = vmatpush.msra.mxu0 %v165
    %196 = vmatpush.msra.mxu0 %v164
    %197 = vmatpush.msra.mxu0 %v163
    %198 = vmatpush.msra.mxu0 %v162
    %199 = vmatmul.f32.gmra.mxu0 %v160
    %v200 = vpop.f32.mrf.mxu0
    %v201 = vadd.f32 %v181, %v200
    %202 = vdwg.mxu0
    %v203 = vmax.f32 %v201, 0.0
    %v204 = vld [vmem:[%s5] sm:$0xff]
    %v205 = vld [vmem:[%s5 + $0x8] sm:$0xff]
    %v206 = vld [vmem:[%s5 + $0x10] sm:$0xff]
    %v207 = vld [vmem:[%s5 + $0x18] sm:$0xff]
    %v208 = vld [vmem:[%s5 + $0x20] sm:$0xff]
    %v209 = vld [vmem:[%s5 + $0x28] sm:$0xff]
    %v210 = vld [vmem:[%s5 + $0x30] sm:$0xff]
    %v211 = vld [vmem:[%s5 + $0x38] sm:$0xff]
    %v212 = vld [vmem:[%s5 + $0x40] sm:$0xff]
    %v213 = vld [vmem:[%s5 + $0x48] sm:$0xff]
    %v214 = vld [vmem:[%s5 + $0x50] sm:$0xff]
    %v215 = vld [vmem:[%s5 + $0x58] sm:$0xff]
    %v216 = vld [vmem:[%s5 + $0x60] sm:$0xff]
    %v217 = vld [vmem:[%s5 + $0x68] sm:$0xff]
    %v218 = vld [vmem:[%s5 + $0x70] sm:$0xff]
    %v219 = vld [vmem:[%s5 + $0x78] sm:$0xff]
    %v220 = vld [vmem:[%s6] sm:$0x1]
    %v222 = vperm.slane %v220, 0
    %224 = vmatpush.msra.mxu0 %v219
    %225 = vmatpush.msra.mxu0 %v218
    %226 = vmatpush.msra.mxu0 %v217
    %227 = vmatpush.msra.mxu0 %v216
    %228 = vmatpush.msra.mxu0 %v215
    %229 = vmatpush.msra.mxu0 %v214
    %230 = vmatpush.msra.mxu0 %v213
    %231 = vmatpush.msra.mxu0 %v212
    %232 = vmatpush.msra.mxu0 %v211
    %233 = vmatpush.msra.mxu0 %v210
    %234 = vmatpush.msra.mxu0 %v209
    %235 = vmatpush.msra.mxu0 %v208
    %236 = vmatpush.msra.mxu0 %v207
    %237 = vmatpush.msra.mxu0 %v206
    %238 = vmatpush.msra.mxu0 %v205
    %239 = vmatpush.msra.mxu0 %v204
    %240 = vmatmul.f32.gmra.mxu0 %v203
    %v241 = vpop.f32.mrf.mxu0
    %v242 = vadd.f32 %v222, %v241
    %243 = vdwg.mxu0
    %vm244 = vcmask 58368
    %245 = vst.msk [vmem:[#allocation5] sm:$0x3] %vm244, %v242
    // Predicated region
    $region34: #{actor_forward.1} parent=1 // pred_check
      _
    $region35: #{actor_forward.1} parent=1 // pred_check_branch
      %247 = sbr.rel (0) target = $region37
    $region36: #{actor_forward.1} parent=1 // pred_region
      %249 = vsyncadd [#allocation4], 0
      %s251 = sshll.u32 [#allocation5], 4
      %s252 = int_to_ptr.vmem [resolvable:$true] %s251
      %s253 = sshll.u32 %s7, 4
      %s254 = int_to_ptr.hbm [resolvable:$true] %s253
      %256 = dma.vmem_to_hbm [thread:$0]  %s252, 32, %s254, [#allocation4]
    $region37: #{actor_forward.1} parent=1 // pred_fallthru
      _
    // Predicated region
    $region38: #{actor_forward.1} parent=1 // pred_check
      _
    $region39: #{actor_forward.1} parent=1 // pred_check_branch
      %258 = sbr.rel (0) target = $region41
    $region40: #{actor_forward.1} parent=1 // pred_region
      %260 = dma.done [#allocation4], 32
    $region41: #{actor_forward.1} parent=1 // pred_fallthru
      _
    %261 = vsyncpa [#allocation3], 1
    %262 = vsyncpa [#allocation4], 1

</llo_original>
